<compile_context>
chip_gen: v5e
topology: v5e:2x2
jax: 0.10.0
libtpu: 0.0.40
codegen_flags: <defaults>
</compile_context>

<pallas_src>
import math
from functools import partial

import jax
import jax.numpy as jnp
from jax.experimental import pallas as pl
from jax.experimental.pallas import tpu as pltpu


def _round_up(n, m):
    return ((n + m - 1) // m) * m


def mlp_kernel(x_ref, w1_ref, w2_ref, o_ref, *, bias_lane):
    # x_ref : (B_tile, Dp)  — column `D` holds 1.0 (bias lane), rest of pad = 0
    # w1_ref: (Dp, Hp)      — row `D` holds b1, other pad rows/cols = 0
    # w2_ref: (Hp, Op)      — row `H` (== bias_lane) holds b2, other pad = 0
    h = jnp.dot(x_ref[...], w1_ref[...], preferred_element_type=jnp.float32)

    # Numerically-stable sigmoid: one EUP exp, one divide, one select.
    e = jnp.exp(-jnp.abs(h))
    num = jnp.where(h >= 0, jnp.float32(1.0), e)
    h = num / (1.0 + e)

    # Force the second-layer bias lane to exactly 1.0 so row `bias_lane` of
    # w2_ref contributes b2.  (Other padded lanes hit zero rows of w2_ref.)
    col = jax.lax.broadcasted_iota(jnp.int32, h.shape, 1)
    h = jnp.where(col == bias_lane, jnp.float32(1.0), h)

    y = jnp.dot(h, w2_ref[...], preferred_element_type=jnp.float32)
    o_ref[...] = y.astype(o_ref.dtype)


def mlp_forward(x, w1, b1, w2, b2, *, batch_tile=512):
    """Computes sigmoid(x @ w1 + b1) @ w2 + b2 with a Pallas TPU kernel.

    w1: (D, H), b1: (H,), w2: (H, O), b2: (O,)  (weights are (in, out), i.e.
    transposed w.r.t. PyTorch nn.Linear storage).
    """
    B, D = x.shape
    H = w1.shape[1]
    O = w2.shape[1]

    # Lane-dense padded sizes (need one extra slot in D and H for the folded bias).
    Dp = _round_up(D + 1, 128)
    Hp = _round_up(H + 1, 128)
    Op = _round_up(O, 128)

    # Build bias-folded, lane-dense operands (plain XLA ops in the wrapper).
    x_aug = jnp.zeros((B, Dp), jnp.float32).at[:, :D].set(x.astype(jnp.float32))
    x_aug = x_aug.at[:, D].set(1.0)
    w1_aug = jnp.zeros((Dp, Hp), jnp.float32).at[:D, :H].set(w1.astype(jnp.float32))
    w1_aug = w1_aug.at[D, :H].set(b1.reshape(-1).astype(jnp.float32))
    w2_aug = jnp.zeros((Hp, Op), jnp.float32).at[:H, :O].set(w2.astype(jnp.float32))
    w2_aug = w2_aug.at[H, :O].set(b2.reshape(-1).astype(jnp.float32))

    kernel = partial(mlp_kernel, bias_lane=H)

    batch_tile = _round_up(max(batch_tile, 8), 8)

    if B <= batch_tile:
        # Small batch: single shot, no grid / no pipeline machinery.
        y = pl.pallas_call(
            kernel,
            out_shape=jax.ShapeDtypeStruct((B, Op), jnp.float32),
            in_specs=[pl.BlockSpec(memory_space=pltpu.MemorySpace.VMEM)] * 3,
            out_specs=pl.BlockSpec(memory_space=pltpu.MemorySpace.VMEM),
        )(x_aug, w1_aug, w2_aug)
    else:
        # Large batch: tile over rows only; weights stay resident in VMEM
        # (index_map ignores the grid index), batch axis is "parallel".
        TB = batch_tile
        Bp = _round_up(B, TB)
        if Bp != B:
            x_aug = jnp.zeros((Bp, Dp), jnp.float32).at[:B].set(x_aug)
        y = pl.pallas_call(
            kernel,
            out_shape=jax.ShapeDtypeStruct((Bp, Op), jnp.float32),
            grid=(Bp // TB,),
            in_specs=[
                pl.BlockSpec((TB, Dp), lambda i: (i, 0)),
                pl.BlockSpec((Dp, Hp), lambda i: (0, 0)),
                pl.BlockSpec((Hp, Op), lambda i: (0, 0)),
            ],
            out_specs=pl.BlockSpec((TB, Op), lambda i: (i, 0)),
            compiler_params=pltpu.CompilerParams(
                dimension_semantics=("parallel",)
            ),
        )(x_aug, w1_aug, w2_aug)
        y = y[:B]

    return y[:, :O].astype(x.dtype)


if __name__ == "__main__":
    # Shapes consistent with the module: batch=8, input_dim=16, hidden=32, out=10.
    batch, input_dim, hidden_size, out_dim = 8, 16, 32, 10

    key = jax.random.PRNGKey(0)
    kx, kw1, kb1, kw2, kb2, kx2 = jax.random.split(key, 6)

    bound1 = 1.0 / math.sqrt(input_dim)
    bound2 = 1.0 / math.sqrt(hidden_size)
    x = jax.random.normal(kx, (batch, input_dim), dtype=jnp.float32)
    w1 = jax.random.uniform(kw1, (input_dim, hidden_size), jnp.float32, -bound1, bound1)
    b1 = jax.random.uniform(kb1, (hidden_size,), jnp.float32, -bound1, bound1)
    w2 = jax.random.uniform(kw2, (hidden_size, out_dim), jnp.float32, -bound2, bound2)
    b2 = jax.random.uniform(kb2, (out_dim,), jnp.float32, -bound2, bound2)

    def ref_fn(xx):
        return jax.nn.sigmoid(xx @ w1 + b1) @ w2 + b2

    # 1) Small batch -> gridless single-shot path.
    out_small = mlp_forward(x, w1, b1, w2, b2)
    jax.block_until_ready(out_small)
    assert out_small.shape == (batch, out_dim)
    assert jnp.allclose(out_small, ref_fn(x), atol=1e-5, rtol=1e-5)

    # 2) Larger (ragged) batch -> batch-tiled path with resident weights.
    x_big = jax.random.normal(kx2, (1000, input_dim), dtype=jnp.float32)
    out_big = mlp_forward(x_big, w1, b1, w2, b2, batch_tile=256)
    jax.block_until_ready(out_big)
    assert out_big.shape == (1000, out_dim)
    assert jnp.allclose(out_big, ref_fn(x_big), atol=1e-5, rtol=1e-5)

    print("KERNEL_OK")
</pallas_src>

<mosaic_0001>
module attributes {stable_mosaic.version = 11 : i64} {
  func.func @mlp_kernel(%arg0: memref<8x128xf32, #tpu.memory_space<vmem>>, %arg1: memref<128x128xf32, #tpu.memory_space<vmem>>, %arg2: memref<128x128xf32, #tpu.memory_space<vmem>>, %arg3: memref<8x128xf32, #tpu.memory_space<vmem>>) attributes {dimension_semantics = [], scalar_prefetch = 0 : i64, scratch_operands = 0 : i64, tpu.core_type = #tpu.core_type<tc>} {
    %c0 = arith.constant 0 : index
    %c0_0 = arith.constant 0 : index
    %0 = vector.load %arg0[%c0, %c0_0] : memref<8x128xf32, #tpu.memory_space<vmem>>, vector<8x128xf32>
    %c0_1 = arith.constant 0 : index
    %c0_2 = arith.constant 0 : index
    %1 = vector.load %arg1[%c0_1, %c0_2] : memref<128x128xf32, #tpu.memory_space<vmem>>, vector<128x128xf32>
    %cst = arith.constant dense<0.000000e+00> : vector<8x128xf32>
    %2 = tpu.matmul %0, %1, %cst {dimension_numbers = #tpu.dot_dimension_numbers<[1], [0], [0], [1], [0, 0, 1, 1], [], []>} : vector<8x128xf32>, vector<128x128xf32>, vector<8x128xf32> -> vector<8x128xf32>
    %3 = math.absf %2 : vector<8x128xf32>
    %cst_3 = arith.constant 0.000000e+00 : f32
    %4 = vector.broadcast %cst_3 : f32 to vector<8x128xf32>
    %5 = arith.subf %4, %3 : vector<8x128xf32>
    %6 = math.exp %5 : vector<8x128xf32>
    %cst_4 = arith.constant 0.000000e+00 : f32
    %7 = vector.broadcast %cst_4 : f32 to vector<8x128xf32>
    %8 = arith.cmpf oge, %2, %7 : vector<8x128xf32>
    %cst_5 = arith.constant 1.000000e+00 : f32
    %9 = vector.broadcast %cst_5 : f32 to vector<8x128xf32>
    %10 = arith.select %8, %9, %6 : vector<8x128xi1>, vector<8x128xf32>
    %cst_6 = arith.constant 1.000000e+00 : f32
    %11 = vector.broadcast %cst_6 : f32 to vector<8x128xf32>
    %12 = arith.addf %11, %6 : vector<8x128xf32>
    %13 = arith.divf %10, %12 : vector<8x128xf32>
    %14 = tpu.iota {dimensions = array<i32: 1>} : vector<8x128xi32>
    %c32_i32 = arith.constant 32 : i32
    %15 = vector.broadcast %c32_i32 : i32 to vector<8x128xi32>
    %16 = arith.cmpi eq, %14, %15 : vector<8x128xi32>
    %cst_7 = arith.constant 1.000000e+00 : f32
    %17 = vector.broadcast %cst_7 : f32 to vector<8x128xf32>
    %18 = arith.select %16, %17, %13 : vector<8x128xi1>, vector<8x128xf32>
    %c0_8 = arith.constant 0 : index
    %c0_9 = arith.constant 0 : index
    %19 = vector.load %arg2[%c0_8, %c0_9] : memref<128x128xf32, #tpu.memory_space<vmem>>, vector<128x128xf32>
    %cst_10 = arith.constant dense<0.000000e+00> : vector<8x128xf32>
    %20 = tpu.matmul %18, %19, %cst_10 {dimension_numbers = #tpu.dot_dimension_numbers<[1], [0], [0], [1], [0, 0, 1, 1], [], []>} : vector<8x128xf32>, vector<128x128xf32>, vector<8x128xf32> -> vector<8x128xf32>
    %c0_11 = arith.constant 0 : index
    %c0_12 = arith.constant 0 : index
    %21 = vector.load %arg3[%c0_11, %c0_12] : memref<8x128xf32, #tpu.memory_space<vmem>>, vector<8x128xf32>
    tpu.vector_store %arg3[%c0_11, %c0_12], %20 {strides = array<i32>} : memref<8x128xf32, #tpu.memory_space<vmem>>, vector<8x128xf32>,
    return
  }
}

</mosaic_0001>

<llo_original>
// kernel: tpu_custom_call.1
$region0: #{tpu_custom_call.1}
  #allocation0 [shape = 'u32[]', space=smem, size = 0x4, offset = 0x4, fixed_abs, tag = 'smem constant byte address 0x4 - core index']
  #allocation1 [shape = 'u32[72,128]{1,0:T(1,128)}', space=vmem, size = 0x9000, scoped, tag = 'internal scratch']
  %s0 = inlined_call_operand.hbm [shape: f32[8,128], index: 0, kind: input, shape index: {}]
  %s1 = inlined_call_operand.hbm [shape: f32[128,128], index: 1, kind: input, shape index: {}]
  %s2 = inlined_call_operand.hbm [shape: f32[128,128], index: 2, kind: input, shape index: {}]
  %s3 = inlined_call_operand.hbm [shape: f32[8,128], index: 3, kind: output, shape index: {}]
  %s4 = sld [smem:[#allocation0]]
  $region34: #{tpu_custom_call.1} parent=0
    _
  %s6 = ssub.s32 1, %s4
  %s7 = scalar_select 0, %s6, %s4
  $region1: #{tpu_custom_call.1} parent=0
    #allocation2 [shape = 'u8[4096]{0}', space=vmem, size = 0x1000, scoped, tag = 'input window, operand 0, single buffered']
    #allocation3 [shape = 's32[1]{0}', space=sflag, size = 0x4, scoped, tag = 'scoped memory for tpu_custom_call.1']
    #allocation4 [shape = 's32[1]{0}', space=sflag, size = 0x4, scoped, tag = 'scoped memory for tpu_custom_call.1']
    #allocation5 [shape = 'u8[65536]{0}', space=vmem, size = 0x10000, scoped, tag = 'input window, operand 1, single buffered']
    #allocation6 [shape = 's32[1]{0}', space=sflag, size = 0x4, scoped, tag = 'scoped memory for tpu_custom_call.1']
    #allocation7 [shape = 'u8[65536]{0}', space=vmem, size = 0x10000, scoped, tag = 'input window, operand 2, single buffered']
    #allocation8 [shape = 'u8[4096]{0}', space=vmem, size = 0x1000, scoped, tag = 'output window, operand 0, single buffered']
    %8 = vsyncpa [#allocation3], 0
    %9 = vsyncpa [#allocation6], 0
    %10 = vsyncpa [#allocation4], 0
    // Predicated region
    $region2: #{tpu_custom_call.1} parent=1 // pred_check
      _
    $region3: #{tpu_custom_call.1} parent=1 // pred_check_branch
      %12 = sbr.rel (0) target = $region5
    $region4: #{tpu_custom_call.1} parent=1 // pred_region
      %14 = vsyncadd [#allocation3], 0
      %s16 = sshll.u32 %s0, 4
      %s17 = int_to_ptr.hbm [resolvable:$true] %s16
      %s18 = sshll.u32 [#allocation2], 4
      %s19 = int_to_ptr.vmem [resolvable:$true] %s18
      %21 = dma.hbm_to_vmem [thread:$0]  %s17, 128, %s19, [#allocation3]
    $region5: #{tpu_custom_call.1} parent=1 // pred_fallthru
      _
    // Predicated region
    $region6: #{tpu_custom_call.1} parent=1 // pred_check
      _
    $region7: #{tpu_custom_call.1} parent=1 // pred_check_branch
      %23 = sbr.rel (0) target = $region9
    $region8: #{tpu_custom_call.1} parent=1 // pred_region
      %25 = vsyncadd [#allocation6], 0
      %s26 = sshll.u32 %s1, 4
      %s27 = int_to_ptr.hbm [resolvable:$true] %s26
      %s28 = sshll.u32 [#allocation5], 4
      %s29 = int_to_ptr.vmem [resolvable:$true] %s28
      %34 = dma.hbm_to_vmem [thread:$0]  %s27, 2048, %s29, [#allocation6], 128, 128, 8
    $region9: #{tpu_custom_call.1} parent=1 // pred_fallthru
      _
    // Predicated region
    $region10: #{tpu_custom_call.1} parent=1 // pred_check
      _
    $region11: #{tpu_custom_call.1} parent=1 // pred_check_branch
      %36 = sbr.rel (0) target = $region13
    $region12: #{tpu_custom_call.1} parent=1 // pred_region
      %38 = vsyncadd [#allocation6], 0
      %s39 = sshll.u32 %s2, 4
      %s40 = int_to_ptr.hbm [resolvable:$true] %s39
      %s41 = sshll.u32 [#allocation7], 4
      %s42 = int_to_ptr.vmem [resolvable:$true] %s41
      %47 = dma.hbm_to_vmem [thread:$0]  %s40, 2048, %s42, [#allocation6], 128, 128, 8
    $region13: #{tpu_custom_call.1} parent=1 // pred_fallthru
      _
    // Predicated region
    $region14: #{tpu_custom_call.1} parent=1 // pred_check
      _
    $region15: #{tpu_custom_call.1} parent=1 // pred_check_branch
      %49 = sbr.rel (0) target = $region17
    $region16: #{tpu_custom_call.1} parent=1 // pred_region
      %51 = dma.done [#allocation3], 128
    $region17: #{tpu_custom_call.1} parent=1 // pred_fallthru
      _
    // Predicated region
    $region18: #{tpu_custom_call.1} parent=1 // pred_check
      _
    $region19: #{tpu_custom_call.1} parent=1 // pred_check_branch
      %53 = sbr.rel (0) target = $region21
    $region20: #{tpu_custom_call.1} parent=1 // pred_region
      %55 = dma.done [#allocation6], 2048
    $region21: #{tpu_custom_call.1} parent=1 // pred_fallthru
      _
    // Predicated region
    $region22: #{tpu_custom_call.1} parent=1 // pred_check
      _
    $region23: #{tpu_custom_call.1} parent=1 // pred_check_branch
      %57 = sbr.rel (0) target = $region25
    $region24: #{tpu_custom_call.1} parent=1 // pred_region
      %59 = dma.done [#allocation6], 2048
    $region25: #{tpu_custom_call.1} parent=1 // pred_fallthru
      _
    %v60 = vld [vmem:[#allocation2] sm:$0xff]
    %v61 = vld [vmem:[#allocation5] sm:$0xff]
    %v62 = vld [vmem:[#allocation5 + $0x8] sm:$0xff]
    %v63 = vld [vmem:[#allocation5 + $0x10] sm:$0xff]
    %v64 = vld [vmem:[#allocation5 + $0x18] sm:$0xff]
    %v65 = vld [vmem:[#allocation5 + $0x20] sm:$0xff]
    %v66 = vld [vmem:[#allocation5 + $0x28] sm:$0xff]
    %v67 = vld [vmem:[#allocation5 + $0x30] sm:$0xff]
    %v68 = vld [vmem:[#allocation5 + $0x38] sm:$0xff]
    %v69 = vld [vmem:[#allocation5 + $0x40] sm:$0xff]
    %v70 = vld [vmem:[#allocation5 + $0x48] sm:$0xff]
    %v71 = vld [vmem:[#allocation5 + $0x50] sm:$0xff]
    %v72 = vld [vmem:[#allocation5 + $0x58] sm:$0xff]
    %v73 = vld [vmem:[#allocation5 + $0x60] sm:$0xff]
    %v74 = vld [vmem:[#allocation5 + $0x68] sm:$0xff]
    %v75 = vld [vmem:[#allocation5 + $0x70] sm:$0xff]
    %v76 = vld [vmem:[#allocation5 + $0x78] sm:$0xff]
    %77 = vmatpush.msra.mxu0 %v76
    %78 = vmatpush.msra.mxu0 %v75
    %79 = vmatpush.msra.mxu0 %v74
    %80 = vmatpush.msra.mxu0 %v73
    %81 = vmatpush.msra.mxu0 %v72
    %82 = vmatpush.msra.mxu0 %v71
    %83 = vmatpush.msra.mxu0 %v70
    %84 = vmatpush.msra.mxu0 %v69
    %85 = vmatpush.msra.mxu0 %v68
    %86 = vmatpush.msra.mxu0 %v67
    %87 = vmatpush.msra.mxu0 %v66
    %88 = vmatpush.msra.mxu0 %v65
    %89 = vmatpush.msra.mxu0 %v64
    %90 = vmatpush.msra.mxu0 %v63
    %91 = vmatpush.msra.mxu0 %v62
    %92 = vmatpush.msra.mxu0 %v61
    %93 = vmatmul.f32.gmra.mxu0 %v60
    %v94 = vpop.f32.mrf.mxu0
    %v95 = vadd.f32 0.0, %v94
    %96 = vdwg.mxu0
    %v97 = vand.u32 2147483647, %v95
    %v98 = vsub.f32 0.0, %v97
    %v99 = vmul.f32 %v98, 1.442695
    %v100 = vpow.pop %v99
    %vm101 = vcmp.ge.f32.partialorder %v95, 0.0
    %v102 = vsel %vm101, 1.0, %v100
    %v103 = vadd.f32 %v100, 1.0
    %v104 = vrcp.pop %v103
    %v105 = vmul.f32 %v103, %v104
    %v106 = vsub.f32 1.0, %v105
    %v107 = vmul.f32 %v104, %v106
    %v108 = vadd.f32 %v104, %v107
    %vm109 = vweird.f32 %v103
    %vm110 = vweird.f32 %v104
    %vm111 = vmor %vm109, %vm110
    %v112 = vsel %vm111, %v104, %v108
    %v113 = vand.u32 2147483647, %v103
    %vm114 = vcmp.eq.f32.partialorder %v113, 8.507059e+37
    %v115 = vand.u32 %v103, 2147483648
    %v116 = vor.u32 1.1754944e-38, %v115
    %v117 = vsel %vm114, %v116, %v112
    %v118 = vmul.f32 %v102, %v117
    %v119 = vlaneseq
    %v120 = vand.u32 %v119, 127
    %vm121 = vcmp.eq.s32.totalorder %v120, 32
    %v122 = vsel %vm121, 1.0, %v118
    %v123 = vld [vmem:[#allocation7] sm:$0xff]
    %v124 = vld [vmem:[#allocation7 + $0x8] sm:$0xff]
    %v125 = vld [vmem:[#allocation7 + $0x10] sm:$0xff]
    %v126 = vld [vmem:[#allocation7 + $0x18] sm:$0xff]
    %v127 = vld [vmem:[#allocation7 + $0x20] sm:$0xff]
    %v128 = vld [vmem:[#allocation7 + $0x28] sm:$0xff]
    %v129 = vld [vmem:[#allocation7 + $0x30] sm:$0xff]
    %v130 = vld [vmem:[#allocation7 + $0x38] sm:$0xff]
    %v131 = vld [vmem:[#allocation7 + $0x40] sm:$0xff]
    %v132 = vld [vmem:[#allocation7 + $0x48] sm:$0xff]
    %v133 = vld [vmem:[#allocation7 + $0x50] sm:$0xff]
    %v134 = vld [vmem:[#allocation7 + $0x58] sm:$0xff]
    %v135 = vld [vmem:[#allocation7 + $0x60] sm:$0xff]
    %v136 = vld [vmem:[#allocation7 + $0x68] sm:$0xff]
    %v137 = vld [vmem:[#allocation7 + $0x70] sm:$0xff]
    %v138 = vld [vmem:[#allocation7 + $0x78] sm:$0xff]
    %139 = vmatpush.msra.mxu0 %v138
    %140 = vmatpush.msra.mxu0 %v137
    %141 = vmatpush.msra.mxu0 %v136
    %142 = vmatpush.msra.mxu0 %v135
    %143 = vmatpush.msra.mxu0 %v134
    %144 = vmatpush.msra.mxu0 %v133
    %145 = vmatpush.msra.mxu0 %v132
    %146 = vmatpush.msra.mxu0 %v131
    %147 = vmatpush.msra.mxu0 %v130
    %148 = vmatpush.msra.mxu0 %v129
    %149 = vmatpush.msra.mxu0 %v128
    %150 = vmatpush.msra.mxu0 %v127
    %151 = vmatpush.msra.mxu0 %v126
    %152 = vmatpush.msra.mxu0 %v125
    %153 = vmatpush.msra.mxu0 %v124
    %154 = vmatpush.msra.mxu0 %v123
    %155 = vmatmul.f32.gmra.mxu0 %v122
    %v156 = vpop.f32.mrf.mxu0
    %v157 = vadd.f32 0.0, %v156
    %158 = vdwg.mxu0
    %159 = vst [vmem:[#allocation8] sm:$0xff] %v157
    // Predicated region
    $region26: #{tpu_custom_call.1} parent=1 // pred_check
      _
    $region27: #{tpu_custom_call.1} parent=1 // pred_check_branch
      %161 = sbr.rel (0) target = $region29
    $region28: #{tpu_custom_call.1} parent=1 // pred_region
      %163 = vsyncadd [#allocation4], 0
      %s165 = sshll.u32 [#allocation8], 4
      %s166 = int_to_ptr.vmem [resolvable:$true] %s165
      %s167 = sshll.u32 %s3, 4
      %s168 = int_to_ptr.hbm [resolvable:$true] %s167
      %170 = dma.vmem_to_hbm [thread:$0]  %s166, 128, %s168, [#allocation4]
    $region29: #{tpu_custom_call.1} parent=1 // pred_fallthru
      _
    // Predicated region
    $region30: #{tpu_custom_call.1} parent=1 // pred_check
      _
    $region31: #{tpu_custom_call.1} parent=1 // pred_check_branch
      %172 = sbr.rel (0) target = $region33
    $region32: #{tpu_custom_call.1} parent=1 // pred_region
      %174 = dma.done [#allocation4], 128
    $region33: #{tpu_custom_call.1} parent=1 // pred_fallthru
      _
    %175 = vsyncpa [#allocation3], 1
    %176 = vsyncpa [#allocation6], 1
    %177 = vsyncpa [#allocation4], 1

</llo_original>
